<compile_context>
chip_gen: v7x
topology: tpu7x:2x2x1
jax: 0.10.0
libtpu: 0.0.40
codegen_flags: <defaults>
</compile_context>

<pallas_src>
import functools
import math

import jax
import jax.numpy as jnp
from jax.experimental import pallas as pl
from jax.experimental.pallas import tpu as pltpu


def _attention_kernel(x_ref, bias_ref,
                      wqkv_ref, bqkv_ref, wo_ref, bo_ref,
                      o_ref, *, num_head, head_dim):
    """One batch row per grid step; all heads fused into this step.

    x_ref    : (1, S, D)      f32 activations
    bias_ref : (1, 1, S)      f32 additive key-mask bias (-1e6 on padded keys)
    wqkv_ref : (D, 3*H*hd)    bf16 fused [W_q*scale | W_k | W_v]
    bqkv_ref : (1, 3*H*hd)    f32  fused [b_q*scale | b_k | b_v]
    wo_ref   : (H*hd, D)      bf16 ff projection
    bo_ref   : (1, D)         f32  ff bias
    o_ref    : (1, S, D)      f32 output (written once)
    """
    _, S, D = x_ref.shape
    H, hd = num_head, head_dim
    HD = H * hd

    # Single fused QKV projection: bf16 MXU operands, f32 accumulation, f32 bias add.
    x2 = x_ref[0].astype(jnp.bfloat16)                                   # (S, D), cast once
    qkv = jnp.dot(x2, wqkv_ref[...],
                  preferred_element_type=jnp.float32) + bqkv_ref[...]    # (S, 3*HD) f32

    bias = bias_ref[0]                                                   # (1, S) additive bias

    acc = None
    for h in range(H):                                                   # static unroll, H small
        q_h = qkv[:, h * hd:(h + 1) * hd].astype(jnp.bfloat16)           # (S, hd)
        k_h = qkv[:, HD + h * hd:HD + (h + 1) * hd].astype(jnp.bfloat16)
        v_h = qkv[:, 2 * HD + h * hd:2 * HD + (h + 1) * hd].astype(jnp.bfloat16)

        # scores = q_h @ k_h^T (contraction on last dims; no explicit transpose).
        s = jax.lax.dot_general(q_h, k_h, (((1,), (1,)), ((), ())),
                                preferred_element_type=jnp.float32)      # (S, S)
        s = s + bias                                                     # mask bias (per key)

        # Numerically stable softmax over keys; normalization deferred past the PV matmul.
        s = s - jnp.max(s, axis=-1, keepdims=True)
        p = jnp.exp(s)                                                   # f32
        denom = jnp.sum(p, axis=-1, keepdims=True)                       # (S, 1)
        o_h = jnp.dot(p.astype(jnp.bfloat16), v_h,
                      preferred_element_type=jnp.float32)                # (S, hd)
        o_h = o_h * pl.reciprocal(denom, approx=True)                    # EUP, not an [S,S] divide

        # Per-head slice of the ff projection; summing over heads == combine_heads + matmul.
        contrib = jnp.dot(o_h.astype(jnp.bfloat16),
                          wo_ref[h * hd:(h + 1) * hd, :],
                          preferred_element_type=jnp.float32)            # (S, D)
        acc = contrib if acc is None else acc + contrib

    o_ref[0] = (acc + bo_ref[...]).astype(o_ref.dtype)                   # single store


def attention_forward(x, mask, params, *, num_head, head_dim):
    """x: [B, S, D] f32, mask: [B, S] (1.0 keep / 0.0 pad) -> [B, S, D] f32."""
    B, S, D = x.shape
    H, hd = num_head, head_dim
    HD = H * hd
    scale = 1.0 / math.sqrt(hd)

    # Trace-time weight prep (outside the kernel): fuse QKV, fold the 1/sqrt(hd) scale into
    # the Q slice, store matmul weights in bf16 (biases stay f32 for the f32 bias add).
    wqkv = jnp.concatenate(
        [params["wq"] * scale, params["wk"], params["wv"]], axis=1).astype(jnp.bfloat16)
    bqkv = jnp.concatenate(
        [params["bq"] * scale, params["bk"], params["bv"]], axis=1).astype(jnp.float32)
    wo = params["wo"].astype(jnp.bfloat16)                               # (HD, D)
    bo = params["bo"].astype(jnp.float32)                                # (1, D)

    # Precomputed additive key-mask bias: 0 on kept keys, -1e6 on padded keys.
    neg_bias = (-1000000.0 * (1.0 - mask.astype(jnp.float32))).reshape(B, 1, S)

    kernel = functools.partial(_attention_kernel, num_head=H, head_dim=hd)

    grid_spec = pltpu.PrefetchScalarGridSpec(
        num_scalar_prefetch=0,
        grid=(B,),                                                       # one step per batch row
        in_specs=[
            pl.BlockSpec((1, S, D), lambda b: (b, 0, 0)),                # X
            pl.BlockSpec((1, 1, S), lambda b: (b, 0, 0)),                # mask bias
            pl.BlockSpec((D, 3 * HD), lambda b: (0, 0)),                 # fused W_qkv (resident)
            pl.BlockSpec((1, 3 * HD), lambda b: (0, 0)),                 # fused b_qkv (resident)
            pl.BlockSpec((HD, D), lambda b: (0, 0)),                     # ff W (resident)
            pl.BlockSpec((1, D), lambda b: (0, 0)),                      # ff b (resident)
        ],
        out_specs=pl.BlockSpec((1, S, D), lambda b: (b, 0, 0)),
    )

    return pl.pallas_call(
        kernel,
        out_shape=jax.ShapeDtypeStruct((B, S, D), jnp.float32),
        grid_spec=grid_spec,
        compiler_params=pltpu.CompilerParams(
            dimension_semantics=("parallel",),
            vmem_limit_bytes=32 * 1024 * 1024),
    )(x, neg_bias, wqkv, bqkv, wo, bo)


def attention_reference(x, mask, params, *, num_head, head_dim):
    """Pure-JAX f32 reference mirroring the PyTorch forward."""
    B, S, D = x.shape
    HD = num_head * head_dim

    def proj(w, b):
        return x @ w + b[0]

    def split(t):  # [B,S,HD] -> [B,H,S,hd]
        return t.reshape(B, S, num_head, head_dim).transpose(0, 2, 1, 3)

    Q, K, V = (split(proj(params[w], params[b]))
               for w, b in (("wq", "bq"), ("wk", "bk"), ("wv", "bv")))
    dot = jnp.einsum("bhqd,bhkd->bhqk", Q, K) / math.sqrt(head_dim)
    dot = dot - 1000000.0 * (1.0 - mask[:, None, None, :])
    attn = jax.nn.softmax(dot, axis=-1)
    Xo = jnp.einsum("bhqk,bhkd->bhqd", attn, V)
    Xo = Xo.transpose(0, 2, 1, 3).reshape(B, S, HD)
    return Xo @ params["wo"] + params["bo"][0]


if __name__ == "__main__":
    # config: dim=32, num_head=4, head_dim=8, dropout_prob=0.0
    B, S, D = 2, 8, 32
    num_head, head_dim = 4, 8
    HD = num_head * head_dim

    key = jax.random.PRNGKey(0)
    ks = jax.random.split(key, 10)
    scale_in = 1.0 / math.sqrt(D)
    scale_hd = 1.0 / math.sqrt(HD)
    params = {
        "wq": jax.random.uniform(ks[0], (D, HD), jnp.float32, -scale_in, scale_in),
        "bq": jax.random.uniform(ks[1], (1, HD), jnp.float32, -scale_in, scale_in),
        "wk": jax.random.uniform(ks[2], (D, HD), jnp.float32, -scale_in, scale_in),
        "bk": jax.random.uniform(ks[3], (1, HD), jnp.float32, -scale_in, scale_in),
        "wv": jax.random.uniform(ks[4], (D, HD), jnp.float32, -scale_in, scale_in),
        "bv": jax.random.uniform(ks[5], (1, HD), jnp.float32, -scale_in, scale_in),
        "wo": jax.random.uniform(ks[6], (HD, D), jnp.float32, -scale_hd, scale_hd),
        "bo": jax.random.uniform(ks[7], (1, D), jnp.float32, -scale_hd, scale_hd),
    }

    x = jax.random.normal(ks[8], (B, S, D), jnp.float32)
    # mask: first batch fully visible, second batch has last 3 positions padded
    mask = jnp.ones((B, S), jnp.float32).at[1, S - 3:].set(0.0)

    out = attention_forward(x, mask, params, num_head=num_head, head_dim=head_dim)
    out = jax.block_until_ready(out)

    ref = attention_reference(x, mask, params, num_head=num_head, head_dim=head_dim)
    assert out.shape == (B, S, D)
    # bf16 MXU operands + approx reciprocal => loosened tolerance vs. the f32 reference.
    assert jnp.allclose(out, ref, atol=2e-2, rtol=2e-2), "mismatch vs JAX reference"

    print("KERNEL_OK")
</pallas_src>

<mosaic_0001>
module attributes {stable_mosaic.version = 11 : i64} {
  func.func @_attention_kernel(%arg0: i32, %arg1: memref<1x8x32xf32, #tpu.memory_space<vmem>>, %arg2: memref<1x1x8xf32, #tpu.memory_space<vmem>>, %arg3: memref<32x96xbf16, #tpu.memory_space<vmem>>, %arg4: memref<1x96xf32, #tpu.memory_space<vmem>>, %arg5: memref<32x32xbf16, #tpu.memory_space<vmem>>, %arg6: memref<1x32xf32, #tpu.memory_space<vmem>>, %arg7: memref<1x8x32xf32, #tpu.memory_space<vmem>>) attributes {dimension_semantics = [#tpu.dimension_semantics<parallel>], iteration_bounds = array<i64: 2>, scalar_prefetch = 0 : i64, scratch_operands = 0 : i64, tpu.core_type = #tpu.core_type<tc>, window_params = [{transform_indices = @transform_0, window_bounds = array<i64: 1, 8, 32>}, {transform_indices = @transform_1, window_bounds = array<i64: 1, 1, 8>}, {pipeline_mode = #tpu.pipeline_mode<synchronous>, transform_indices = @transform_2, window_bounds = array<i64: 32, 96>}, {pipeline_mode = #tpu.pipeline_mode<synchronous>, transform_indices = @transform_3, window_bounds = array<i64: 1, 96>}, {pipeline_mode = #tpu.pipeline_mode<synchronous>, transform_indices = @transform_4, window_bounds = array<i64: 32, 32>}, {pipeline_mode = #tpu.pipeline_mode<synchronous>, transform_indices = @transform_5, window_bounds = array<i64: 1, 32>}, {transform_indices = @transform_6, window_bounds = array<i64: 1, 8, 32>}]} {
    %c0 = arith.constant 0 : index
    %c0_0 = arith.constant 0 : index
    %c0_1 = arith.constant 0 : index
    %0 = vector.load %arg1[%c0, %c0_0, %c0_1] : memref<1x8x32xf32, #tpu.memory_space<vmem>>, vector<1x8x32xf32>
    %1 = vector.shape_cast %0 : vector<1x8x32xf32> to vector<8x32xf32>
    %2 = arith.truncf %1 : vector<8x32xf32> to vector<8x32xbf16>
    %c0_2 = arith.constant 0 : index
    %c0_3 = arith.constant 0 : index
    %3 = vector.load %arg3[%c0_2, %c0_3] : memref<32x96xbf16, #tpu.memory_space<vmem>>, vector<32x96xbf16>
    %cst = arith.constant dense<0.000000e+00> : vector<8x96xf32>
    %4 = tpu.matmul %2, %3, %cst {dimension_numbers = #tpu.dot_dimension_numbers<[1], [0], [0], [1], [0, 0, 1, 1], [], []>} : vector<8x32xbf16>, vector<32x96xbf16>, vector<8x96xf32> -> vector<8x96xf32>
    %c0_4 = arith.constant 0 : index
    %c0_5 = arith.constant 0 : index
    %5 = vector.load %arg4[%c0_4, %c0_5] : memref<1x96xf32, #tpu.memory_space<vmem>>, vector<1x96xf32>
    %6 = vector.broadcast %5 : vector<1x96xf32> to vector<8x96xf32>
    %7 = arith.addf %4, %6 : vector<8x96xf32>
    %c0_6 = arith.constant 0 : index
    %c0_7 = arith.constant 0 : index
    %c0_8 = arith.constant 0 : index
    %8 = vector.load %arg2[%c0_6, %c0_7, %c0_8] : memref<1x1x8xf32, #tpu.memory_space<vmem>>, vector<1x1x8xf32>
    %9 = vector.shape_cast %8 : vector<1x1x8xf32> to vector<1x8xf32>
    %10 = vector.extract_strided_slice %7 {offsets = [0, 0], sizes = [8, 8], strides = [1, 1]} : vector<8x96xf32> to vector<8x8xf32>
    %11 = arith.truncf %10 : vector<8x8xf32> to vector<8x8xbf16>
    %12 = vector.extract_strided_slice %7 {offsets = [0, 32], sizes = [8, 8], strides = [1, 1]} : vector<8x96xf32> to vector<8x8xf32>
    %13 = arith.truncf %12 : vector<8x8xf32> to vector<8x8xbf16>
    %14 = vector.extract_strided_slice %7 {offsets = [0, 64], sizes = [8, 8], strides = [1, 1]} : vector<8x96xf32> to vector<8x8xf32>
    %15 = arith.truncf %14 : vector<8x8xf32> to vector<8x8xbf16>
    %cst_9 = arith.constant dense<0.000000e+00> : vector<8x8xf32>
    %16 = tpu.matmul %11, %13, %cst_9 {dimension_numbers = #tpu.dot_dimension_numbers<[1], [1], [0], [0], [0, 0, 1, 0], [], []>} : vector<8x8xbf16>, vector<8x8xbf16>, vector<8x8xf32> -> vector<8x8xf32>
    %17 = vector.broadcast %9 : vector<1x8xf32> to vector<8x8xf32>
    %18 = arith.addf %16, %17 : vector<8x8xf32>
    %cst_10 = arith.constant dense<0xFF800000> : vector<8xf32>
    %19 = vector.multi_reduction <maximumf>, %18, %cst_10 [1] : vector<8x8xf32> to vector<8xf32>
    %20 = vector.shape_cast %19 : vector<8xf32> to vector<8x1xf32>
    %21 = vector.broadcast %20 : vector<8x1xf32> to vector<8x8xf32>
    %22 = arith.subf %18, %21 : vector<8x8xf32>
    %23 = math.exp %22 : vector<8x8xf32>
    %cst_11 = arith.constant dense<0.000000e+00> : vector<8xf32>
    %24 = vector.multi_reduction <add>, %23, %cst_11 [1] : vector<8x8xf32> to vector<8xf32>
    %25 = vector.shape_cast %24 : vector<8xf32> to vector<8x1xf32>
    %26 = arith.truncf %23 : vector<8x8xf32> to vector<8x8xbf16>
    %cst_12 = arith.constant dense<0.000000e+00> : vector<8x8xf32>
    %27 = tpu.matmul %26, %15, %cst_12 {dimension_numbers = #tpu.dot_dimension_numbers<[1], [0], [0], [1], [0, 0, 1, 1], [], []>} : vector<8x8xbf16>, vector<8x8xbf16>, vector<8x8xf32> -> vector<8x8xf32>
    %28 = tpu.reciprocal %25 {approx = true} : vector<8x1xf32> -> vector<8x1xf32>
    %29 = vector.broadcast %28 : vector<8x1xf32> to vector<8x8xf32>
    %30 = arith.mulf %27, %29 : vector<8x8xf32>
    %31 = arith.truncf %30 : vector<8x8xf32> to vector<8x8xbf16>
    %c0_13 = arith.constant 0 : index
    %c0_14 = arith.constant 0 : index
    %32 = vector.load %arg5[%c0_13, %c0_14] : memref<32x32xbf16, #tpu.memory_space<vmem>>, vector<8x32xbf16>
    %cst_15 = arith.constant dense<0.000000e+00> : vector<8x32xf32>
    %33 = tpu.matmul %31, %32, %cst_15 {dimension_numbers = #tpu.dot_dimension_numbers<[1], [0], [0], [1], [0, 0, 1, 1], [], []>} : vector<8x8xbf16>, vector<8x32xbf16>, vector<8x32xf32> -> vector<8x32xf32>
    %34 = vector.extract_strided_slice %7 {offsets = [0, 8], sizes = [8, 8], strides = [1, 1]} : vector<8x96xf32> to vector<8x8xf32>
    %35 = arith.truncf %34 : vector<8x8xf32> to vector<8x8xbf16>
    %36 = vector.extract_strided_slice %7 {offsets = [0, 40], sizes = [8, 8], strides = [1, 1]} : vector<8x96xf32> to vector<8x8xf32>
    %37 = arith.truncf %36 : vector<8x8xf32> to vector<8x8xbf16>
    %38 = vector.extract_strided_slice %7 {offsets = [0, 72], sizes = [8, 8], strides = [1, 1]} : vector<8x96xf32> to vector<8x8xf32>
    %39 = arith.truncf %38 : vector<8x8xf32> to vector<8x8xbf16>
    %cst_16 = arith.constant dense<0.000000e+00> : vector<8x8xf32>
    %40 = tpu.matmul %35, %37, %cst_16 {dimension_numbers = #tpu.dot_dimension_numbers<[1], [1], [0], [0], [0, 0, 1, 0], [], []>} : vector<8x8xbf16>, vector<8x8xbf16>, vector<8x8xf32> -> vector<8x8xf32>
    %41 = vector.broadcast %9 : vector<1x8xf32> to vector<8x8xf32>
    %42 = arith.addf %40, %41 : vector<8x8xf32>
    %cst_17 = arith.constant dense<0xFF800000> : vector<8xf32>
    %43 = vector.multi_reduction <maximumf>, %42, %cst_17 [1] : vector<8x8xf32> to vector<8xf32>
    %44 = vector.shape_cast %43 : vector<8xf32> to vector<8x1xf32>
    %45 = vector.broadcast %44 : vector<8x1xf32> to vector<8x8xf32>
    %46 = arith.subf %42, %45 : vector<8x8xf32>
    %47 = math.exp %46 : vector<8x8xf32>
    %cst_18 = arith.constant dense<0.000000e+00> : vector<8xf32>
    %48 = vector.multi_reduction <add>, %47, %cst_18 [1] : vector<8x8xf32> to vector<8xf32>
    %49 = vector.shape_cast %48 : vector<8xf32> to vector<8x1xf32>
    %50 = arith.truncf %47 : vector<8x8xf32> to vector<8x8xbf16>
    %cst_19 = arith.constant dense<0.000000e+00> : vector<8x8xf32>
    %51 = tpu.matmul %50, %39, %cst_19 {dimension_numbers = #tpu.dot_dimension_numbers<[1], [0], [0], [1], [0, 0, 1, 1], [], []>} : vector<8x8xbf16>, vector<8x8xbf16>, vector<8x8xf32> -> vector<8x8xf32>
    %52 = tpu.reciprocal %49 {approx = true} : vector<8x1xf32> -> vector<8x1xf32>
    %53 = vector.broadcast %52 : vector<8x1xf32> to vector<8x8xf32>
    %54 = arith.mulf %51, %53 : vector<8x8xf32>
    %55 = arith.truncf %54 : vector<8x8xf32> to vector<8x8xbf16>
    %c8 = arith.constant 8 : index
    %c0_20 = arith.constant 0 : index
    %56 = vector.load %arg5[%c8, %c0_20] : memref<32x32xbf16, #tpu.memory_space<vmem>>, vector<8x32xbf16>
    %cst_21 = arith.constant dense<0.000000e+00> : vector<8x32xf32>
    %57 = tpu.matmul %55, %56, %cst_21 {dimension_numbers = #tpu.dot_dimension_numbers<[1], [0], [0], [1], [0, 0, 1, 1], [], []>} : vector<8x8xbf16>, vector<8x32xbf16>, vector<8x32xf32> -> vector<8x32xf32>
    %58 = arith.addf %33, %57 : vector<8x32xf32>
    %59 = vector.extract_strided_slice %7 {offsets = [0, 16], sizes = [8, 8], strides = [1, 1]} : vector<8x96xf32> to vector<8x8xf32>
    %60 = arith.truncf %59 : vector<8x8xf32> to vector<8x8xbf16>
    %61 = vector.extract_strided_slice %7 {offsets = [0, 48], sizes = [8, 8], strides = [1, 1]} : vector<8x96xf32> to vector<8x8xf32>
    %62 = arith.truncf %61 : vector<8x8xf32> to vector<8x8xbf16>
    %63 = vector.extract_strided_slice %7 {offsets = [0, 80], sizes = [8, 8], strides = [1, 1]} : vector<8x96xf32> to vector<8x8xf32>
    %64 = arith.truncf %63 : vector<8x8xf32> to vector<8x8xbf16>
    %cst_22 = arith.constant dense<0.000000e+00> : vector<8x8xf32>
    %65 = tpu.matmul %60, %62, %cst_22 {dimension_numbers = #tpu.dot_dimension_numbers<[1], [1], [0], [0], [0, 0, 1, 0], [], []>} : vector<8x8xbf16>, vector<8x8xbf16>, vector<8x8xf32> -> vector<8x8xf32>
    %66 = vector.broadcast %9 : vector<1x8xf32> to vector<8x8xf32>
    %67 = arith.addf %65, %66 : vector<8x8xf32>
    %cst_23 = arith.constant dense<0xFF800000> : vector<8xf32>
    %68 = vector.multi_reduction <maximumf>, %67, %cst_23 [1] : vector<8x8xf32> to vector<8xf32>
    %69 = vector.shape_cast %68 : vector<8xf32> to vector<8x1xf32>
    %70 = vector.broadcast %69 : vector<8x1xf32> to vector<8x8xf32>
    %71 = arith.subf %67, %70 : vector<8x8xf32>
    %72 = math.exp %71 : vector<8x8xf32>
    %cst_24 = arith.constant dense<0.000000e+00> : vector<8xf32>
    %73 = vector.multi_reduction <add>, %72, %cst_24 [1] : vector<8x8xf32> to vector<8xf32>
    %74 = vector.shape_cast %73 : vector<8xf32> to vector<8x1xf32>
    %75 = arith.truncf %72 : vector<8x8xf32> to vector<8x8xbf16>
    %cst_25 = arith.constant dense<0.000000e+00> : vector<8x8xf32>
    %76 = tpu.matmul %75, %64, %cst_25 {dimension_numbers = #tpu.dot_dimension_numbers<[1], [0], [0], [1], [0, 0, 1, 1], [], []>} : vector<8x8xbf16>, vector<8x8xbf16>, vector<8x8xf32> -> vector<8x8xf32>
    %77 = tpu.reciprocal %74 {approx = true} : vector<8x1xf32> -> vector<8x1xf32>
    %78 = vector.broadcast %77 : vector<8x1xf32> to vector<8x8xf32>
    %79 = arith.mulf %76, %78 : vector<8x8xf32>
    %80 = arith.truncf %79 : vector<8x8xf32> to vector<8x8xbf16>
    %c16 = arith.constant 16 : index
    %c0_26 = arith.constant 0 : index
    %81 = vector.load %arg5[%c16, %c0_26] : memref<32x32xbf16, #tpu.memory_space<vmem>>, vector<8x32xbf16>
    %cst_27 = arith.constant dense<0.000000e+00> : vector<8x32xf32>
    %82 = tpu.matmul %80, %81, %cst_27 {dimension_numbers = #tpu.dot_dimension_numbers<[1], [0], [0], [1], [0, 0, 1, 1], [], []>} : vector<8x8xbf16>, vector<8x32xbf16>, vector<8x32xf32> -> vector<8x32xf32>
    %83 = arith.addf %58, %82 : vector<8x32xf32>
    %84 = vector.extract_strided_slice %7 {offsets = [0, 24], sizes = [8, 8], strides = [1, 1]} : vector<8x96xf32> to vector<8x8xf32>
    %85 = arith.truncf %84 : vector<8x8xf32> to vector<8x8xbf16>
    %86 = vector.extract_strided_slice %7 {offsets = [0, 56], sizes = [8, 8], strides = [1, 1]} : vector<8x96xf32> to vector<8x8xf32>
    %87 = arith.truncf %86 : vector<8x8xf32> to vector<8x8xbf16>
    %88 = vector.extract_strided_slice %7 {offsets = [0, 88], sizes = [8, 8], strides = [1, 1]} : vector<8x96xf32> to vector<8x8xf32>
    %89 = arith.truncf %88 : vector<8x8xf32> to vector<8x8xbf16>
    %cst_28 = arith.constant dense<0.000000e+00> : vector<8x8xf32>
    %90 = tpu.matmul %85, %87, %cst_28 {dimension_numbers = #tpu.dot_dimension_numbers<[1], [1], [0], [0], [0, 0, 1, 0], [], []>} : vector<8x8xbf16>, vector<8x8xbf16>, vector<8x8xf32> -> vector<8x8xf32>
    %91 = vector.broadcast %9 : vector<1x8xf32> to vector<8x8xf32>
    %92 = arith.addf %90, %91 : vector<8x8xf32>
    %cst_29 = arith.constant dense<0xFF800000> : vector<8xf32>
    %93 = vector.multi_reduction <maximumf>, %92, %cst_29 [1] : vector<8x8xf32> to vector<8xf32>
    %94 = vector.shape_cast %93 : vector<8xf32> to vector<8x1xf32>
    %95 = vector.broadcast %94 : vector<8x1xf32> to vector<8x8xf32>
    %96 = arith.subf %92, %95 : vector<8x8xf32>
    %97 = math.exp %96 : vector<8x8xf32>
    %cst_30 = arith.constant dense<0.000000e+00> : vector<8xf32>
    %98 = vector.multi_reduction <add>, %97, %cst_30 [1] : vector<8x8xf32> to vector<8xf32>
    %99 = vector.shape_cast %98 : vector<8xf32> to vector<8x1xf32>
    %100 = arith.truncf %97 : vector<8x8xf32> to vector<8x8xbf16>
    %cst_31 = arith.constant dense<0.000000e+00> : vector<8x8xf32>
    %101 = tpu.matmul %100, %89, %cst_31 {dimension_numbers = #tpu.dot_dimension_numbers<[1], [0], [0], [1], [0, 0, 1, 1], [], []>} : vector<8x8xbf16>, vector<8x8xbf16>, vector<8x8xf32> -> vector<8x8xf32>
    %102 = tpu.reciprocal %99 {approx = true} : vector<8x1xf32> -> vector<8x1xf32>
    %103 = vector.broadcast %102 : vector<8x1xf32> to vector<8x8xf32>
    %104 = arith.mulf %101, %103 : vector<8x8xf32>
    %105 = arith.truncf %104 : vector<8x8xf32> to vector<8x8xbf16>
    %c24 = arith.constant 24 : index
    %c0_32 = arith.constant 0 : index
    %106 = vector.load %arg5[%c24, %c0_32] : memref<32x32xbf16, #tpu.memory_space<vmem>>, vector<8x32xbf16>
    %cst_33 = arith.constant dense<0.000000e+00> : vector<8x32xf32>
    %107 = tpu.matmul %105, %106, %cst_33 {dimension_numbers = #tpu.dot_dimension_numbers<[1], [0], [0], [1], [0, 0, 1, 1], [], []>} : vector<8x8xbf16>, vector<8x32xbf16>, vector<8x32xf32> -> vector<8x32xf32>
    %108 = arith.addf %83, %107 : vector<8x32xf32>
    %c0_34 = arith.constant 0 : index
    %c0_35 = arith.constant 0 : index
    %109 = vector.load %arg6[%c0_34, %c0_35] : memref<1x32xf32, #tpu.memory_space<vmem>>, vector<1x32xf32>
    %110 = vector.broadcast %109 : vector<1x32xf32> to vector<8x32xf32>
    %111 = arith.addf %108, %110 : vector<8x32xf32>
    %c0_36 = arith.constant 0 : index
    %c0_37 = arith.constant 0 : index
    %c0_38 = arith.constant 0 : index
    %112 = vector.load %arg7[%c0_36, %c0_37, %c0_38] : memref<1x8x32xf32, #tpu.memory_space<vmem>>, vector<1x8x32xf32>
    %113 = vector.shape_cast %112 : vector<1x8x32xf32> to vector<8x32xf32>
    %114 = vector.shape_cast %111 : vector<8x32xf32> to vector<1x8x32xf32>
    tpu.vector_store %arg7[%c0_36, %c0_37, %c0_38], %114 {strides = array<i32>} : memref<1x8x32xf32, #tpu.memory_space<vmem>>, vector<1x8x32xf32>,
    return
  }
  func.func @transform_0(%arg0: i32) -> (i32, i32, i32) {
    %c0_i32 = arith.constant 0 : i32
    %c0_i32_0 = arith.constant 0 : i32
    %c0_i32_1 = arith.constant 0 : i32
    return %arg0, %c0_i32, %c0_i32_0 : i32, i32, i32
  }
  func.func @transform_1(%arg0: i32) -> (i32, i32, i32) {
    %c0_i32 = arith.constant 0 : i32
    %c0_i32_0 = arith.constant 0 : i32
    %c0_i32_1 = arith.constant 0 : i32
    return %arg0, %c0_i32, %c0_i32_0 : i32, i32, i32
  }
  func.func @transform_2(%arg0: i32) -> (i32, i32) {
    %c0_i32 = arith.constant 0 : i32
    %c0_i32_0 = arith.constant 0 : i32
    %c0_i32_1 = arith.constant 0 : i32
    return %c0_i32, %c0_i32_0 : i32, i32
  }
  func.func @transform_3(%arg0: i32) -> (i32, i32) {
    %c0_i32 = arith.constant 0 : i32
    %c0_i32_0 = arith.constant 0 : i32
    %c0_i32_1 = arith.constant 0 : i32
    return %c0_i32, %c0_i32_0 : i32, i32
  }
  func.func @transform_4(%arg0: i32) -> (i32, i32) {
    %c0_i32 = arith.constant 0 : i32
    %c0_i32_0 = arith.constant 0 : i32
    %c0_i32_1 = arith.constant 0 : i32
    return %c0_i32, %c0_i32_0 : i32, i32
  }
  func.func @transform_5(%arg0: i32) -> (i32, i32) {
    %c0_i32 = arith.constant 0 : i32
    %c0_i32_0 = arith.constant 0 : i32
    %c0_i32_1 = arith.constant 0 : i32
    return %c0_i32, %c0_i32_0 : i32, i32
  }
  func.func @transform_6(%arg0: i32) -> (i32, i32, i32) {
    %c0_i32 = arith.constant 0 : i32
    %c0_i32_0 = arith.constant 0 : i32
    %c0_i32_1 = arith.constant 0 : i32
    return %arg0, %c0_i32, %c0_i32_0 : i32, i32, i32
  }
}

</mosaic_0001>

<llo_original>
// kernel: tpu_custom_call.1
$region0: #{tpu_custom_call.1}
  #allocation0 [shape = 'u32[]', space=smem, size = 0x4, offset = 0x4, fixed_abs, tag = 'smem constant byte address 0x4 - core index']
  #allocation1 [shape = 'u32[144,128]{1,0:T(1,128)}', space=vmem, size = 0x12000, scoped, tag = 'internal scratch']
  %s0 = inlined_call_operand.hbm [shape: f32[2,8,32], index: 0, kind: input, shape index: {}]
  %s1 = inlined_call_operand.vmem [shape: f32[2,1,8], index: 1, kind: input, shape index: {}]
  %s2 = inlined_call_operand.hbm [shape: bf16[32,96], index: 2, kind: input, shape index: {}]
  %s3 = inlined_call_operand.vmem [shape: f32[1,96], index: 3, kind: input, shape index: {}]
  %s4 = inlined_call_operand.hbm [shape: bf16[32,32], index: 4, kind: input, shape index: {}]
  %s5 = inlined_call_operand.vmem [shape: f32[1,32], index: 5, kind: input, shape index: {}]
  %s6 = inlined_call_operand.hbm [shape: f32[2,8,32], index: 6, kind: output, shape index: {}]
  %s7 = sld [smem:[#allocation0]]
  $region69: #{tpu_custom_call.1} parent=0
    _
  %s9 = ssub.s32 1, %s7
  %s10 = scalar_select 0, %s9, %s7
  $region1: #{tpu_custom_call.1} parent=0
    #allocation2 [shape = 'u8[8192]{0}', space=vmem, size = 0x2000, scoped, tag = 'input window, operand 0']
    #allocation3 [shape = 's32[2]{0}', space=sflag, size = 0x8, scoped, tag = 'scoped memory for tpu_custom_call.1']
    #allocation4 [shape = 's32[2]{0}', space=sflag, size = 0x8, scoped, tag = 'scoped memory for tpu_custom_call.1']
    #allocation5 [shape = 'u8[8192]{0}', space=vmem, size = 0x2000, scoped, tag = 'input window, operand 2, single buffered']
    #allocation6 [shape = 's32[1]{0}', space=sflag, size = 0x4, scoped, tag = 'scoped memory for tpu_custom_call.1']
    #allocation7 [shape = 'u8[8192]{0}', space=vmem, size = 0x2000, scoped, tag = 'input window, operand 4, single buffered']
    #allocation8 [shape = 'u8[8192]{0}', space=vmem, size = 0x2000, scoped, tag = 'output window, operand 0']
    %11 = vsyncpa [#allocation3], 0
    %s12 = scalar_lea.sflag [#allocation3], 1
    %13 = vsyncpa %s12, 0
    %14 = vsyncpa [#allocation6], 0
    %15 = vsyncpa [#allocation4], 0
    %s16 = scalar_lea.sflag [#allocation4], 1
    %17 = vsyncpa %s16, 0
    loop: start=0, step=1, limit=4
    $region2: #{tpu_custom_call.1} parent=1 // loop_pre_header
      _
    $region3: #{tpu_custom_call.1} parent=1 // loop_header
      %s19 = sphi 0, %s23
      %p20 = scmp.ge.s32.totalorder %s19, 4
      %s29 = sphi 0, %s31
      %s32 = sphi 0, %s29
      %s33 = sphi 0, %s32
      %s49 = sphi 0, %s33
      %s55 = sphi 0, %s57
      %s58 = sphi 0, %s55
      %s59 = sphi 0, %s58
      %s75 = sphi 0, %s59
      %s79 = sphi 0, %s79
      %s81 = sphi 0, %s79
      %s82 = sphi 0, %s81
      %s96 = sphi 0, %s82
      %s100 = sphi 0, %s100
      %s102 = sphi 0, %s100
      %s103 = sphi 0, %s102
      %s117 = sphi 0, %s103
      %s121 = sphi 0, %s121
      %s123 = sphi 0, %s121
      %s124 = sphi 0, %s123
      %s138 = sphi 0, %s124
      %s142 = sphi 0, %s142
      %s144 = sphi 0, %s142
      %s145 = sphi 0, %s144
      %s159 = sphi 0, %s145
      %s165 = sphi 0, %s167
      %s168 = sphi 0, %s165
      %s169 = sphi 0, %s168
      %s185 = sphi 0, %s169
    $region4: #{tpu_custom_call.1} parent=1 // loop_header_branch
      %22 = sbr.rel (%p20) target = $region8
    $region5: #{tpu_custom_call.1} parent=1 // loop_body
      %s24 = ssub.s32 %s19, 1
      %s25 = ssub.s32 %s19, 2
      %s26 = sadd.s32 %s19, 1
      %s27 = ssub.s32 %s19, %s26
      %p28 = scmp.eq.s32.totalorder %s27, 0
      %s30 = sadd.s32 %s29, 1
      %s31 = scalar_select %p28, %s29, %s30
      %p34 = pneg %p28
      %p35 = scmp.eq.s32.totalorder %s19, 1
      %p36 = por %p34, %p35
      %p37 = scmp.ne.s32.totalorder %s29, %s32
      %p38 = scmp.eq.s32.totalorder %s19, 0
      %p39 = por %p37, %p38
      %p40 = scmp.ne.s32.totalorder %s29, %s32
      %p41 = scmp.eq.s32.totalorder %s24, 1
      %p42 = por %p40, %p41
      %p43 = scmp.ne.s32.totalorder %s32, %s33
      %p44 = scmp.eq.s32.totalorder %s24, 0
      %p45 = por %p43, %p44
      %p46 = scmp.ne.s32.totalorder %s32, %s33
      %p47 = scmp.eq.s32.totalorder %s25, 1
      %p48 = por %p46, %p47
      %p50 = scmp.ne.s32.totalorder %s33, %s49
      %p51 = scmp.eq.s32.totalorder %s25, 0
      %p52 = por %p50, %p51
      %s53 = ssub.s32 %s19, %s26
      %p54 = scmp.eq.s32.totalorder %s53, 0
      %s56 = sadd.s32 %s55, 1
      %s57 = scalar_select %p54, %s55, %s56
      %p60 = pneg %p54
      %p61 = scmp.eq.s32.totalorder %s19, 1
      %p62 = por %p60, %p61
      %p63 = scmp.ne.s32.totalorder %s55, %s58
      %p64 = scmp.eq.s32.totalorder %s19, 0
      %p65 = por %p63, %p64
      %p66 = scmp.ne.s32.totalorder %s55, %s58
      %p67 = scmp.eq.s32.totalorder %s24, 1
      %p68 = por %p66, %p67
      %p69 = scmp.ne.s32.totalorder %s58, %s59
      %p70 = scmp.eq.s32.totalorder %s24, 0
      %p71 = por %p69, %p70
      %p72 = scmp.ne.s32.totalorder %s58, %s59
      %p73 = scmp.eq.s32.totalorder %s25, 1
      %p74 = por %p72, %p73
      %p76 = scmp.ne.s32.totalorder %s59, %s75
      %p77 = scmp.eq.s32.totalorder %s25, 0
      %p78 = por %p76, %p77
      %s80 = sadd.s32 %s79, 1
      %p83 = scmp.eq.s32.totalorder %s19, 1
      %p84 = scmp.ne.s32.totalorder %s79, %s81
      %p85 = scmp.eq.s32.totalorder %s19, 0
      %p86 = por %p84, %p85
      %p87 = scmp.ne.s32.totalorder %s79, %s81
      %p88 = scmp.eq.s32.totalorder %s24, 1
      %p89 = por %p87, %p88
      %p90 = scmp.ne.s32.totalorder %s81, %s82
      %p91 = scmp.eq.s32.totalorder %s24, 0
      %p92 = por %p90, %p91
      %p93 = scmp.ne.s32.totalorder %s81, %s82
      %p94 = scmp.eq.s32.totalorder %s25, 1
      %p95 = por %p93, %p94
      %p97 = scmp.ne.s32.totalorder %s82, %s96
      %p98 = scmp.eq.s32.totalorder %s25, 0
      %p99 = por %p97, %p98
      %s101 = sadd.s32 %s100, 1
      %p104 = scmp.eq.s32.totalorder %s19, 1
      %p105 = scmp.ne.s32.totalorder %s100, %s102
      %p106 = scmp.eq.s32.totalorder %s19, 0
      %p107 = por %p105, %p106
      %p108 = scmp.ne.s32.totalorder %s100, %s102
      %p109 = scmp.eq.s32.totalorder %s24, 1
      %p110 = por %p108, %p109
      %p111 = scmp.ne.s32.totalorder %s102, %s103
      %p112 = scmp.eq.s32.totalorder %s24, 0
      %p113 = por %p111, %p112
      %p114 = scmp.ne.s32.totalorder %s102, %s103
      %p115 = scmp.eq.s32.totalorder %s25, 1
      %p116 = por %p114, %p115
      %p118 = scmp.ne.s32.totalorder %s103, %s117
      %p119 = scmp.eq.s32.totalorder %s25, 0
      %p120 = por %p118, %p119
      %s122 = sadd.s32 %s121, 1
      %p125 = scmp.eq.s32.totalorder %s19, 1
      %p126 = scmp.ne.s32.totalorder %s121, %s123
      %p127 = scmp.eq.s32.totalorder %s19, 0
      %p128 = por %p126, %p127
      %p129 = scmp.ne.s32.totalorder %s121, %s123
      %p130 = scmp.eq.s32.totalorder %s24, 1
      %p131 = por %p129, %p130
      %p132 = scmp.ne.s32.totalorder %s123, %s124
      %p133 = scmp.eq.s32.totalorder %s24, 0
      %p134 = por %p132, %p133
      %p135 = scmp.ne.s32.totalorder %s123, %s124
      %p136 = scmp.eq.s32.totalorder %s25, 1
      %p137 = por %p135, %p136
      %p139 = scmp.ne.s32.totalorder %s124, %s138
      %p140 = scmp.eq.s32.totalorder %s25, 0
      %p141 = por %p139, %p140
      %s143 = sadd.s32 %s142, 1
      %p146 = scmp.eq.s32.totalorder %s19, 1
      %p147 = scmp.ne.s32.totalorder %s142, %s144
      %p148 = scmp.eq.s32.totalorder %s19, 0
      %p149 = por %p147, %p148
      %p150 = scmp.ne.s32.totalorder %s142, %s144
      %p151 = scmp.eq.s32.totalorder %s24, 1
      %p152 = por %p150, %p151
      %p153 = scmp.ne.s32.totalorder %s144, %s145
      %p154 = scmp.eq.s32.totalorder %s24, 0
      %p155 = por %p153, %p154
      %p156 = scmp.ne.s32.totalorder %s144, %s145
      %p157 = scmp.eq.s32.totalorder %s25, 1
      %p158 = por %p156, %p157
      %p160 = scmp.ne.s32.totalorder %s145, %s159
      %p161 = scmp.eq.s32.totalorder %s25, 0
      %p162 = por %p160, %p161
      %s163 = ssub.s32 %s19, %s26
      %p164 = scmp.eq.s32.totalorder %s163, 0
      %s166 = sadd.s32 %s165, 1
      %s167 = scalar_select %p164, %s165, %s166
      %p170 = pneg %p164
      %p171 = scmp.eq.s32.totalorder %s19, 1
      %p172 = por %p170, %p171
      %p173 = scmp.ne.s32.totalorder %s165, %s168
      %p174 = scmp.eq.s32.totalorder %s19, 0
      %p175 = por %p173, %p174
      %p176 = scmp.ne.s32.totalorder %s165, %s168
      %p177 = scmp.eq.s32.totalorder %s24, 1
      %p178 = por %p176, %p177
      %p179 = scmp.ne.s32.totalorder %s168, %s169
      %p180 = scmp.eq.s32.totalorder %s24, 0
      %p181 = por %p179, %p180
      %p182 = scmp.ne.s32.totalorder %s168, %s169
      %p183 = scmp.eq.s32.totalorder %s25, 1
      %p184 = por %p182, %p183
      %p186 = scmp.ne.s32.totalorder %s169, %s185
      %p187 = scmp.eq.s32.totalorder %s25, 0
      %p188 = por %p186, %p187
      %p189 = scmp.le.s32.totalorder 1, %s19
      %p190 = scmp.lt.s32.totalorder %s19, 3
      %p191 = pnand %p189, %p190
      %p192 = pneg %p191
      // Predicated region
      $region9: #{tpu_custom_call.1} parent=5 // pred_check
        _
      $region10: #{tpu_custom_call.1} parent=5 // pred_check_branch
        %194 = sbr.rel (%p191) target = $region12
      $region11: #{tpu_custom_call.1} parent=5 // pred_region
        %s195 = ssub.s32 %s19, 1
        // Predicated region
        $region13: #{tpu_custom_call.1} parent=11 // pred_check
          %p196 = pneg %p92
        $region14: #{tpu_custom_call.1} parent=11 // pred_check_branch
          %198 = sbr.rel (%p196) target = $region16
        $region15: #{tpu_custom_call.1} parent=11 // pred_region
          %s200 = ssub.s32 256, 256
          %201 = vsyncadd [#allocation6], %s200
          %s202 = sshll.u32 [#allocation5], 4
          %s203 = int_to_ptr.vmem [resolvable:$true] %s202
          %208 = dma.hbm_to_vmem [thread:$0]  %s2, 256, %s203, [#allocation6], 64, 64, 4
        $region16: #{tpu_custom_call.1} parent=11 // pred_fallthru
          _
        // Predicated region
        $region17: #{tpu_custom_call.1} parent=11 // pred_check
          %p209 = pneg %p113
        $region18: #{tpu_custom_call.1} parent=11 // pred_check_branch
          %211 = sbr.rel (%p209) target = $region20
        $region19: #{tpu_custom_call.1} parent=11 // pred_region
          _
        $region20: #{tpu_custom_call.1} parent=11 // pred_fallthru
          _
        // Predicated region
        $region21: #{tpu_custom_call.1} parent=11 // pred_check
          %p212 = pneg %p134
        $region22: #{tpu_custom_call.1} parent=11 // pred_check_branch
          %214 = sbr.rel (%p212) target = $region24
        $region23: #{tpu_custom_call.1} parent=11 // pred_region
          %s216 = ssub.s32 256, 256
          %217 = vsyncadd [#allocation6], %s216
          %s218 = sshll.u32 [#allocation7], 4
          %s219 = int_to_ptr.vmem [resolvable:$true] %s218
          %224 = dma.hbm_to_vmem [thread:$0]  %s4, 256, %s219, [#allocation6], 64, 64, 4
        $region24: #{tpu_custom_call.1} parent=11 // pred_fallthru
          _
        // Predicated region
        $region25: #{tpu_custom_call.1} parent=11 // pred_check
          %p225 = pneg %p155
        $region26: #{tpu_custom_call.1} parent=11 // pred_check_branch
          %227 = sbr.rel (%p225) target = $region28
        $region27: #{tpu_custom_call.1} parent=11 // pred_region
          _
        $region28: #{tpu_custom_call.1} parent=11 // pred_fallthru
          _
      $region12: #{tpu_custom_call.1} parent=5 // pred_fallthru
        _
      %p228 = scmp.lt.s32.totalorder %s19, 2
      // Predicated region
      $region29: #{tpu_custom_call.1} parent=5 // pred_check
        %p229 = pneg %p228
      $region30: #{tpu_custom_call.1} parent=5 // pred_check_branch
        %231 = sbr.rel (%p229) target = $region32
      $region31: #{tpu_custom_call.1} parent=5 // pred_region
        // Predicated region
        $region33: #{tpu_custom_call.1} parent=31 // pred_check
          %p232 = pneg %p39
        $region34: #{tpu_custom_call.1} parent=31 // pred_check_branch
          %234 = sbr.rel (%p232) target = $region36
        $region35: #{tpu_custom_call.1} parent=31 // pred_region
          %s235 = sand.u32 %s29, 1
          %s236 = scalar_lea.sflag [#allocation3], %s235
          %s237 = sand.u32 %s29, 1
          %s238 = smul.addr %s237, 8
          %s239 = scalar_lea.vmem [#allocation2], %s238
          %s241 = ssub.s32 128, 128
          %242 = vsyncadd %s236, %s241
          %s243 = smul.addr %s19, 128
          %s244 = scalar_lea.hbm %s0, %s243
          %s246 = sshll.u32 %s239, 4
          %s247 = int_to_ptr.vmem [resolvable:$true] %s246
          %249 = dma.hbm_to_vmem [thread:$0]  %s244, 128, %s247, %s236
        $region36: #{tpu_custom_call.1} parent=31 // pred_fallthru
          _
        // Predicated region
        $region37: #{tpu_custom_call.1} parent=31 // pred_check
          %p250 = pneg %p65
        $region38: #{tpu_custom_call.1} parent=31 // pred_check_branch
          %252 = sbr.rel (%p250) target = $region40
        $region39: #{tpu_custom_call.1} parent=31 // pred_region
          %p253 = scmp.lt.s32.totalorder %s19, 1
          %s254 = scalar_select %p253, %s19, 1
          %s255 = scalar_lea.vmem %s1, %s254
        $region40: #{tpu_custom_call.1} parent=31 // pred_fallthru
          _
      $region32: #{tpu_custom_call.1} parent=5 // pred_fallthru
        _
      %p256 = scmp.le.s32.totalorder 1, %s19
      %p257 = scmp.lt.s32.totalorder %s19, 3
      %p258 = pnand %p256, %p257
      %p259 = pneg %p258
      // Predicated region
      $region41: #{tpu_custom_call.1} parent=5 // pred_check
        _
      $region42: #{tpu_custom_call.1} parent=5 // pred_check_branch
        %261 = sbr.rel (%p258) target = $region44
      $region43: #{tpu_custom_call.1} parent=5 // pred_region
        %s262 = ssub.s32 %s19, 1
        %s263 = sand.u32 %s32, 1
        %s264 = scalar_lea.sflag [#allocation3], %s263
        %s265 = sand.u32 %s32, 1
        %s266 = smul.addr %s265, 8
        %s267 = scalar_lea.vmem [#allocation2], %s266
        // Predicated region
        $region45: #{tpu_custom_call.1} parent=43 // pred_check
          %p268 = pneg %p45
        $region46: #{tpu_custom_call.1} parent=43 // pred_check_branch
          %270 = sbr.rel (%p268) target = $region48
        $region47: #{tpu_custom_call.1} parent=43 // pred_region
          %271 = dma.done %s264, 128
        $region48: #{tpu_custom_call.1} parent=43 // pred_fallthru
          _
        // Predicated region
        $region49: #{tpu_custom_call.1} parent=43 // pred_check
          %p272 = pneg %p92
        $region50: #{tpu_custom_call.1} parent=43 // pred_check_branch
          %274 = sbr.rel (%p272) target = $region52
        $region51: #{tpu_custom_call.1} parent=43 // pred_region
          %275 = dma.done [#allocation6], 256
        $region52: #{tpu_custom_call.1} parent=43 // pred_fallthru
          _
        // Predicated region
        $region53: #{tpu_custom_call.1} parent=43 // pred_check
          %p276 = pneg %p134
        $region54: #{tpu_custom_call.1} parent=43 // pred_check_branch
          %278 = sbr.rel (%p276) target = $region56
        $region55: #{tpu_custom_call.1} parent=43 // pred_region
          %279 = dma.done [#allocation6], 256
        $region56: #{tpu_custom_call.1} parent=43 // pred_fallthru
          _
        %s280 = sand.u32 %s32, 1
        %s281 = scalar_lea.sflag [#allocation3], %s280
        %s282 = sand.u32 %s32, 1
        %s283 = smul.addr %s282, 8
        %s284 = scalar_lea.vmem [#allocation2], %s283
        %p285 = pneg %p45
        %p286 = pneg %p42
        %p287 = scmp.lt.s32.totalorder %s24, 1
        %s288 = scalar_select %p287, %s24, 1
        %s289 = scalar_lea.vmem %s1, %s288
        %p290 = pneg %p71
        %p291 = pneg %p68
        %p292 = pneg %p92
        %p293 = pneg %p89
        %p294 = pneg %p113
        %p295 = pneg %p110
        %p296 = pneg %p134
        %p297 = pneg %p131
        %p298 = pneg %p155
        %p299 = pneg %p152
        %p300 = pneg %p181
        %p301 = pneg %p178
        %s302 = sand.u32 %s168, 1
        %s303 = scalar_lea.sflag [#allocation4], %s302
        %s304 = sand.u32 %s168, 1
        %s305 = smul.addr %s304, 8
        %s306 = scalar_lea.vmem [#allocation8], %s305
        %p307 = scmp.lt.s32.totalorder %s24, 1
        %s308 = scalar_select %p307, %s24, 1
        %s309 = scalar_lea.vmem %s1, %s308
        %v311 = vld [vmem:[%s267] sm:$0xff]
        %v312 = vpack.c.bf16 %v311, %v311
        %v313 = vld [vmem:[#allocation5] sm:$0xf]
        %v314 = vld [vmem:[#allocation5 + $0x4] sm:$0xf]
        %v315 = vld [vmem:[#allocation5 + $0x8] sm:$0xf]
        %v316 = vld [vmem:[#allocation5 + $0xc] sm:$0xf]
        %v317 = vld [vmem:[%s3] sm:$0x1]
        %v319 = vlaneseq
        %v320 = vshrl.u32 %v319, 7
        %v321 = vsub.s32 0, %v320
        %v322 = vrot.slane %v317, %v321
        %v328 = vunpack.c.l.b16 %v313
        %v329 = vunpack.c.l.b16 %v314
        %v330 = vunpack.c.l.b16 %v315
        %v331 = vunpack.c.l.b16 %v316
        %v332 = vpack.c.b16 %v329, %v328
        %v333 = vpack.c.b16 %v331, %v330
        %vm336 = vcmask 261120
        %v338 = vsel %vm336, %v312, 0
        %340 = vmatprep.subr.bf16.mxu0 0
        %341 = vmatpush1.bf16.msra.mxu0 %v332
        %342 = vmatprep.subr.bf16.mxu0 0
        %343 = vmatpush1.bf16.msra.mxu0 %v333
        %344 = vmatprep.subr.bf16.mxu0 0
        %345 = vmatpush1.bf16.msra.mxu0 0
        %346 = vmatprep.subr.bf16.mxu0 0
        %347 = vmatpush1.bf16.msra.mxu0 0
        %348 = vmatprep.subr.bf16.mxu0 0
        %349 = vmatpush1.bf16.msra.mxu0 0
        %350 = vmatprep.subr.bf16.mxu0 0
        %351 = vmatpush1.bf16.msra.mxu0 0
        %352 = vmatprep.subr.bf16.mxu0 0
        %353 = vmatpush1.bf16.msra.mxu0 0
        %354 = vmatprep.subr.bf16.mxu0 0
        %355 = vmatpush1.bf16.msra.mxu0 0
        %356 = vmatprep.subr.bf16.mxu0 0
        %357 = vmatpush1.bf16.msra.mxu0 0
        %358 = vmatprep.subr.bf16.mxu0 0
        %359 = vmatpush1.bf16.msra.mxu0 0
        %360 = vmatprep.subr.bf16.mxu0 0
        %361 = vmatpush1.bf16.msra.mxu0 0
        %362 = vmatprep.subr.bf16.mxu0 0
        %363 = vmatpush1.bf16.msra.mxu0 0
        %364 = vmatprep.subr.bf16.mxu0 0
        %365 = vmatpush1.bf16.msra.mxu0 0
        %366 = vmatprep.subr.bf16.mxu0 0
        %367 = vmatpush1.bf16.msra.mxu0 0
        %368 = vmatprep.subr.bf16.mxu0 0
        %369 = vmatpush1.bf16.msra.mxu0 0
        %370 = vmatprep.subr.bf16.mxu0 0
        %371 = vmatpush1.bf16.msra.mxu0 0
        %372 = vmatprep.mubr.bf16.mxu0 0
        %373 = vmatmul.mubr.bf16.gmra.mrb[0].mxu0 %v338
        %v374 = vpop.f32.mrb[0].mxu0
        %v375 = vadd.f32 %v322, %v374
        %v376 = vpop.f32.mrb[0].mxu0
        %v377 = vpop.f32.mrb[0].mxu0
        %v378 = vpop.f32.mrb[0].mxu0
        %379 = vdwg.mxu0
        %v380 = vld [vmem:[%s309] sm:$0x1]
        %v381 = vpack.c.bf16 %v375, %v375
        %v383 = vlaneseq
        %v384 = vshrl.u32 %v383, 7
        %v385 = vsub.s32 0, %v384
        %v386 = vrot.slane %v380, %v385
        %389 = vrot.lane.b32.xlu0 %v381, 96
        %v390 = vpop.permute.xlu0 %389
        %vm391 = vcmask 64512
        %v393 = vsel %vm391, %v381, 0
        %v396 = vsel %vm391, %v390, 0
        %398 = vmatprep.subr.bf16.mxu0 0
        %399 = vmatpush1.bf16.xpose.msra.mxu0 %v396
        %400 = vmatprep.subr.bf16.mxu0 0
        %401 = vmatpush1.bf16.xpose.msra.mxu0 0
        %402 = vmatprep.subr.bf16.mxu0 0
        %403 = vmatpush1.bf16.xpose.msra.mxu0 0
        %404 = vmatprep.subr.bf16.mxu0 0
        %405 = vmatpush1.bf16.xpose.msra.mxu0 0
        %406 = vmatprep.subr.bf16.mxu0 0
        %407 = vmatpush1.bf16.xpose.msra.mxu0 0
        %408 = vmatprep.subr.bf16.mxu0 0
        %409 = vmatpush1.bf16.xpose.msra.mxu0 0
        %410 = vmatprep.subr.bf16.mxu0 0
        %411 = vmatpush1.bf16.xpose.msra.mxu0 0
        %412 = vmatprep.subr.bf16.mxu0 0
        %413 = vmatpush1.bf16.xpose.msra.mxu0 0
        %414 = vmatprep.subr.bf16.mxu0 0
        %415 = vmatpush1.bf16.xpose.msra.mxu0 0
        %416 = vmatprep.subr.bf16.mxu0 0
        %417 = vmatpush1.bf16.xpose.msra.mxu0 0
        %418 = vmatprep.subr.bf16.mxu0 0
        %419 = vmatpush1.bf16.xpose.msra.mxu0 0
        %420 = vmatprep.subr.bf16.mxu0 0
        %421 = vmatpush1.bf16.xpose.msra.mxu0 0
        %422 = vmatprep.subr.bf16.mxu0 0
        %423 = vmatpush1.bf16.xpose.msra.mxu0 0
        %424 = vmatprep.subr.bf16.mxu0 0
        %425 = vmatpush1.bf16.xpose.msra.mxu0 0
        %426 = vmatprep.subr.bf16.mxu0 0
        %427 = vmatpush1.bf16.xpose.msra.mxu0 0
        %428 = vmatprep.subr.bf16.mxu0 0
        %429 = vmatpush1.bf16.xpose.msra.mxu0 0
        %430 = vmatprep.mubr.bf16.mxu0 0
        %431 = vmatmul.mubr.bf16.gmra.mrb[0].mxu0 %v393
        %v432 = vpop.f32.mrb[0].mxu0
        %v433 = vadd.f32 %v386, %v432
        %v434 = vpop.f32.mrb[0].mxu0
        %v435 = vpop.f32.mrb[0].mxu0
        %v436 = vpop.f32.mrb[0].mxu0
        %437 = vdwg.mxu0
        %v438 = vsel %vm391, %v433, -inf
        %439 = vmax.xlane.f32.xlu0 %v438
        %v440 = vpop.xlane.xlu0 %439
        %v441 = vsub.f32 %v433, %v440
        %v442 = vmul.f32 %v441, 1.442695
        %v443 = vpow.pop %v442
        %v444 = vsel %vm391, %v443, 0.0
        %445 = vadd.xlane.f32.xlu0 %v444
        %v446 = vpop.xlane.xlu0 %445
        %v447 = vpack.c.bf16 %v443, %v443
        %448 = vrot.lane.b32.xlu0 %v381, 64
        %v449 = vpop.permute.xlu0 %448
        %v451 = vsel %vm391, %v447, 0
        %vm453 = vcmask 1043456
        %v455 = vsel %vm453, %v449, 0
        %457 = vmatprep.subr.bf16.mxu0 0
        %458 = vmatpush1.bf16.msra.mxu0 %v455
        %459 = vmatprep.subr.bf16.mxu0 0
        %460 = vmatpush1.bf16.msra.mxu0 0
        %461 = vmatprep.subr.bf16.mxu0 0
        %462 = vmatpush1.bf16.msra.mxu0 0
        %463 = vmatprep.subr.bf16.mxu0 0
        %464 = vmatpush1.bf16.msra.mxu0 0
        %465 = vmatprep.subr.bf16.mxu0 0
        %466 = vmatpush1.bf16.msra.mxu0 0
        %467 = vmatprep.subr.bf16.mxu0 0
        %468 = vmatpush1.bf16.msra.mxu0 0
        %469 = vmatprep.subr.bf16.mxu0 0
        %470 = vmatpush1.bf16.msra.mxu0 0
        %471 = vmatprep.subr.bf16.mxu0 0
        %472 = vmatpush1.bf16.msra.mxu0 0
        %473 = vmatprep.subr.bf16.mxu0 0
        %474 = vmatpush1.bf16.msra.mxu0 0
        %475 = vmatprep.subr.bf16.mxu0 0
        %476 = vmatpush1.bf16.msra.mxu0 0
        %477 = vmatprep.subr.bf16.mxu0 0
        %478 = vmatpush1.bf16.msra.mxu0 0
        %479 = vmatprep.subr.bf16.mxu0 0
        %480 = vmatpush1.bf16.msra.mxu0 0
        %481 = vmatprep.subr.bf16.mxu0 0
        %482 = vmatpush1.bf16.msra.mxu0 0
        %483 = vmatprep.subr.bf16.mxu0 0
        %484 = vmatpush1.bf16.msra.mxu0 0
        %485 = vmatprep.subr.bf16.mxu0 0
        %486 = vmatpush1.bf16.msra.mxu0 0
        %487 = vmatprep.subr.bf16.mxu0 0
        %488 = vmatpush1.bf16.msra.mxu0 0
        %489 = vmatprep.mubr.bf16.mxu0 0
        %490 = vmatmul.mubr.bf16.gmra.mrb[0].mxu0 %v451
        %v491 = vpop.f32.mrb[0].mxu0
        %v492 = vadd.f32 0.0, %v491
        %v493 = vpop.f32.mrb[0].mxu0
        %v494 = vpop.f32.mrb[0].mxu0
        %v495 = vpop.f32.mrb[0].mxu0
        %496 = vdwg.mxu0
        %v497 = vrcp.pop %v446
        %v498 = vmul.f32 %v492, %v497
        %v499 = vpack.c.bf16 %v498, %v498
        %v500 = vld [vmem:[#allocation7] sm:$0xf]
        %501 = vrot.lane.b32.xlu0 %v381, 120
        %v502 = vpop.permute.xlu0 %501
        %503 = vrot.lane.b32.xlu0 %v381, 88
        %v504 = vpop.permute.xlu0 %503
        %v506 = vsel %vm391, %v502, 0
        %v509 = vsel %vm391, %v504, 0
        %511 = vmatprep.subr.bf16.mxu0 0
        %512 = vmatpush1.bf16.xpose.msra.mxu0 %v509
        %513 = vmatprep.subr.bf16.mxu0 0
        %514 = vmatpush1.bf16.xpose.msra.mxu0 0
        %515 = vmatprep.subr.bf16.mxu0 0
        %516 = vmatpush1.bf16.xpose.msra.mxu0 0
        %517 = vmatprep.subr.bf16.mxu0 0
        %518 = vmatpush1.bf16.xpose.msra.mxu0 0
        %519 = vmatprep.subr.bf16.mxu0 0
        %520 = vmatpush1.bf16.xpose.msra.mxu0 0
        %521 = vmatprep.subr.bf16.mxu0 0
        %522 = vmatpush1.bf16.xpose.msra.mxu0 0
        %523 = vmatprep.subr.bf16.mxu0 0
        %524 = vmatpush1.bf16.xpose.msra.mxu0 0
        %525 = vmatprep.subr.bf16.mxu0 0
        %526 = vmatpush1.bf16.xpose.msra.mxu0 0
        %527 = vmatprep.subr.bf16.mxu0 0
        %528 = vmatpush1.bf16.xpose.msra.mxu0 0
        %529 = vmatprep.subr.bf16.mxu0 0
        %530 = vmatpush1.bf16.xpose.msra.mxu0 0
        %531 = vmatprep.subr.bf16.mxu0 0
        %532 = vmatpush1.bf16.xpose.msra.mxu0 0
        %533 = vmatprep.subr.bf16.mxu0 0
        %534 = vmatpush1.bf16.xpose.msra.mxu0 0
        %535 = vmatprep.subr.bf16.mxu0 0
        %536 = vmatpush1.bf16.xpose.msra.mxu0 0
        %537 = vmatprep.subr.bf16.mxu0 0
        %538 = vmatpush1.bf16.xpose.msra.mxu0 0
        %539 = vmatprep.subr.bf16.mxu0 0
        %540 = vmatpush1.bf16.xpose.msra.mxu0 0
        %541 = vmatprep.subr.bf16.mxu0 0
        %542 = vmatpush1.bf16.xpose.msra.mxu0 0
        %543 = vmatprep.mubr.bf16.mxu0 0
        %544 = vmatmul.mubr.bf16.gmra.mrb[0].mxu0 %v506
        %v545 = vpop.f32.mrb[0].mxu0
        %v546 = vadd.f32 %v386, %v545
        %v547 = vpop.f32.mrb[0].mxu0
        %v548 = vpop.f32.mrb[0].mxu0
        %v549 = vpop.f32.mrb[0].mxu0
        %550 = vdwg.mxu0
        %v551 = vsel %vm391, %v546, -inf
        %552 = vmax.xlane.f32.xlu0 %v551
        %v553 = vpop.xlane.xlu0 %552
        %v554 = vsub.f32 %v546, %v553
        %v555 = vmul.f32 %v554, 1.442695
        %v556 = vpow.pop %v555
        %v557 = vsel %vm391, %v556, 0.0
        %558 = vadd.xlane.f32.xlu0 %v557
        %v559 = vpop.xlane.xlu0 %558
        %v560 = vpack.c.bf16 %v556, %v556
        %561 = vrot.lane.b32.xlu0 %v381, 56
        %v562 = vpop.permute.xlu0 %561
        %v564 = vsel %vm391, %v560, 0
        %v567 = vsel %vm453, %v562, 0
        %569 = vmatprep.subr.bf16.mxu0 0
        %570 = vmatpush1.bf16.msra.mxu0 %v567
        %571 = vmatprep.subr.bf16.mxu0 0
        %572 = vmatpush1.bf16.msra.mxu0 0
        %573 = vmatprep.subr.bf16.mxu0 0
        %574 = vmatpush1.bf16.msra.mxu0 0
        %575 = vmatprep.subr.bf16.mxu0 0
        %576 = vmatpush1.bf16.msra.mxu0 0
        %577 = vmatprep.subr.bf16.mxu0 0
        %578 = vmatpush1.bf16.msra.mxu0 0
        %579 = vmatprep.subr.bf16.mxu0 0
        %580 = vmatpush1.bf16.msra.mxu0 0
        %581 = vmatprep.subr.bf16.mxu0 0
        %582 = vmatpush1.bf16.msra.mxu0 0
        %583 = vmatprep.subr.bf16.mxu0 0
        %584 = vmatpush1.bf16.msra.mxu0 0
        %585 = vmatprep.subr.bf16.mxu0 0
        %586 = vmatpush1.bf16.msra.mxu0 0
        %587 = vmatprep.subr.bf16.mxu0 0
        %588 = vmatpush1.bf16.msra.mxu0 0
        %589 = vmatprep.subr.bf16.mxu0 0
        %590 = vmatpush1.bf16.msra.mxu0 0
        %591 = vmatprep.subr.bf16.mxu0 0
        %592 = vmatpush1.bf16.msra.mxu0 0
        %593 = vmatprep.subr.bf16.mxu0 0
        %594 = vmatpush1.bf16.msra.mxu0 0
        %595 = vmatprep.subr.bf16.mxu0 0
        %596 = vmatpush1.bf16.msra.mxu0 0
        %597 = vmatprep.subr.bf16.mxu0 0
        %598 = vmatpush1.bf16.msra.mxu0 0
        %599 = vmatprep.subr.bf16.mxu0 0
        %600 = vmatpush1.bf16.msra.mxu0 0
        %601 = vmatprep.mubr.bf16.mxu0 0
        %602 = vmatmul.mubr.bf16.gmra.mrb[0].mxu0 %v564
        %v603 = vpop.f32.mrb[0].mxu0
        %v604 = vadd.f32 0.0, %v603
        %v605 = vpop.f32.mrb[0].mxu0
        %v606 = vpop.f32.mrb[0].mxu0
        %v607 = vpop.f32.mrb[0].mxu0
        %608 = vdwg.mxu0
        %v609 = vrcp.pop %v559
        %v610 = vmul.f32 %v604, %v609
        %v611 = vpack.c.bf16 %v610, %v610
        %v612 = vld [vmem:[#allocation7 + $0x4] sm:$0xf]
        %v614 = vsel %vm391, %v611, 0
        %v617 = vsel %vm453, %v612, 0
        %619 = vmatprep.subr.bf16.mxu0 0
        %620 = vmatpush1.bf16.msra.mxu0 %v617
        %621 = vmatprep.subr.bf16.mxu0 0
        %622 = vmatpush1.bf16.msra.mxu0 0
        %623 = vmatprep.subr.bf16.mxu0 0
        %624 = vmatpush1.bf16.msra.mxu0 0
        %625 = vmatprep.subr.bf16.mxu0 0
        %626 = vmatpush1.bf16.msra.mxu0 0
        %627 = vmatprep.subr.bf16.mxu0 0
        %628 = vmatpush1.bf16.msra.mxu0 0
        %629 = vmatprep.subr.bf16.mxu0 0
        %630 = vmatpush1.bf16.msra.mxu0 0
        %631 = vmatprep.subr.bf16.mxu0 0
        %632 = vmatpush1.bf16.msra.mxu0 0
        %633 = vmatprep.subr.bf16.mxu0 0
        %634 = vmatpush1.bf16.msra.mxu0 0
        %635 = vmatprep.subr.bf16.mxu0 0
        %636 = vmatpush1.bf16.msra.mxu0 0
        %637 = vmatprep.subr.bf16.mxu0 0
        %638 = vmatpush1.bf16.msra.mxu0 0
        %639 = vmatprep.subr.bf16.mxu0 0
        %640 = vmatpush1.bf16.msra.mxu0 0
        %641 = vmatprep.subr.bf16.mxu0 0
        %642 = vmatpush1.bf16.msra.mxu0 0
        %643 = vmatprep.subr.bf16.mxu0 0
        %644 = vmatpush1.bf16.msra.mxu0 0
        %645 = vmatprep.subr.bf16.mxu0 0
        %646 = vmatpush1.bf16.msra.mxu0 0
        %647 = vmatprep.subr.bf16.mxu0 0
        %648 = vmatpush1.bf16.msra.mxu0 0
        %649 = vmatprep.subr.bf16.mxu0 0
        %650 = vmatpush1.bf16.msra.mxu0 0
        %651 = vmatprep.mubr.bf16.mxu0 0
        %652 = vmatmul.mubr.bf16.gmra.mrb[0].mxu0 %v614
        %v653 = vpop.f32.mrb[0].mxu0
        %v654 = vadd.f32 0.0, %v653
        %v655 = vpop.f32.mrb[0].mxu0
        %v656 = vpop.f32.mrb[0].mxu0
        %v657 = vpop.f32.mrb[0].mxu0
        %658 = vdwg.mxu0
        %v660 = vsel %vm391, %v499, 0
        %v663 = vsel %vm453, %v500, 0
        %665 = vmatprep.subr.bf16.mxu0 0
        %666 = vmatpush1.bf16.msra.mxu0 %v663
        %667 = vmatprep.subr.bf16.mxu0 0
        %668 = vmatpush1.bf16.msra.mxu0 0
        %669 = vmatprep.subr.bf16.mxu0 0
        %670 = vmatpush1.bf16.msra.mxu0 0
        %671 = vmatprep.subr.bf16.mxu0 0
        %672 = vmatpush1.bf16.msra.mxu0 0
        %673 = vmatprep.subr.bf16.mxu0 0
        %674 = vmatpush1.bf16.msra.mxu0 0
        %675 = vmatprep.subr.bf16.mxu0 0
        %676 = vmatpush1.bf16.msra.mxu0 0
        %677 = vmatprep.subr.bf16.mxu0 0
        %678 = vmatpush1.bf16.msra.mxu0 0
        %679 = vmatprep.subr.bf16.mxu0 0
        %680 = vmatpush1.bf16.msra.mxu0 0
        %681 = vmatprep.subr.bf16.mxu0 0
        %682 = vmatpush1.bf16.msra.mxu0 0
        %683 = vmatprep.subr.bf16.mxu0 0
        %684 = vmatpush1.bf16.msra.mxu0 0
        %685 = vmatprep.subr.bf16.mxu0 0
        %686 = vmatpush1.bf16.msra.mxu0 0
        %687 = vmatprep.subr.bf16.mxu0 0
        %688 = vmatpush1.bf16.msra.mxu0 0
        %689 = vmatprep.subr.bf16.mxu0 0
        %690 = vmatpush1.bf16.msra.mxu0 0
        %691 = vmatprep.subr.bf16.mxu0 0
        %692 = vmatpush1.bf16.msra.mxu0 0
        %693 = vmatprep.subr.bf16.mxu0 0
        %694 = vmatpush1.bf16.msra.mxu0 0
        %695 = vmatprep.subr.bf16.mxu0 0
        %696 = vmatpush1.bf16.msra.mxu0 0
        %697 = vmatprep.mubr.bf16.mxu0 0
        %698 = vmatmul.mubr.bf16.gmra.mrb[0].mxu0 %v660
        %v699 = vpop.f32.mrb[0].mxu0
        %v700 = vadd.f32 %v654, %v699
        %v701 = vpop.f32.mrb[0].mxu0
        %v702 = vpop.f32.mrb[0].mxu0
        %v703 = vpop.f32.mrb[0].mxu0
        %704 = vdwg.mxu0
        %705 = vrot.lane.b32.xlu0 %v381, 112
        %v706 = vpop.permute.xlu0 %705
        %707 = vrot.lane.b32.xlu0 %v381, 80
        %v708 = vpop.permute.xlu0 %707
        %v710 = vsel %vm391, %v706, 0
        %v713 = vsel %vm391, %v708, 0
        %715 = vmatprep.subr.bf16.mxu0 0
        %716 = vmatpush1.bf16.xpose.msra.mxu0 %v713
        %717 = vmatprep.subr.bf16.mxu0 0
        %718 = vmatpush1.bf16.xpose.msra.mxu0 0
        %719 = vmatprep.subr.bf16.mxu0 0
        %720 = vmatpush1.bf16.xpose.msra.mxu0 0
        %721 = vmatprep.subr.bf16.mxu0 0
        %722 = vmatpush1.bf16.xpose.msra.mxu0 0
        %723 = vmatprep.subr.bf16.mxu0 0
        %724 = vmatpush1.bf16.xpose.msra.mxu0 0
        %725 = vmatprep.subr.bf16.mxu0 0
        %726 = vmatpush1.bf16.xpose.msra.mxu0 0
        %727 = vmatprep.subr.bf16.mxu0 0
        %728 = vmatpush1.bf16.xpose.msra.mxu0 0
        %729 = vmatprep.subr.bf16.mxu0 0
        %730 = vmatpush1.bf16.xpose.msra.mxu0 0
        %731 = vmatprep.subr.bf16.mxu0 0
        %732 = vmatpush1.bf16.xpose.msra.mxu0 0
        %733 = vmatprep.subr.bf16.mxu0 0
        %734 = vmatpush1.bf16.xpose.msra.mxu0 0
        %735 = vmatprep.subr.bf16.mxu0 0
        %736 = vmatpush1.bf16.xpose.msra.mxu0 0
        %737 = vmatprep.subr.bf16.mxu0 0
        %738 = vmatpush1.bf16.xpose.msra.mxu0 0
        %739 = vmatprep.subr.bf16.mxu0 0
        %740 = vmatpush1.bf16.xpose.msra.mxu0 0
        %741 = vmatprep.subr.bf16.mxu0 0
        %742 = vmatpush1.bf16.xpose.msra.mxu0 0
        %743 = vmatprep.subr.bf16.mxu0 0
        %744 = vmatpush1.bf16.xpose.msra.mxu0 0
        %745 = vmatprep.subr.bf16.mxu0 0
        %746 = vmatpush1.bf16.xpose.msra.mxu0 0
        %747 = vmatprep.mubr.bf16.mxu0 0
        %748 = vmatmul.mubr.bf16.gmra.mrb[0].mxu0 %v710
        %v749 = vpop.f32.mrb[0].mxu0
        %v750 = vadd.f32 %v386, %v749
        %v751 = vpop.f32.mrb[0].mxu0
        %v752 = vpop.f32.mrb[0].mxu0
        %v753 = vpop.f32.mrb[0].mxu0
        %754 = vdwg.mxu0
        %v755 = vsel %vm391, %v750, -inf
        %756 = vmax.xlane.f32.xlu0 %v755
        %v757 = vpop.xlane.xlu0 %756
        %v758 = vsub.f32 %v750, %v757
        %v759 = vmul.f32 %v758, 1.442695
        %v760 = vpow.pop %v759
        %v761 = vsel %vm391, %v760, 0.0
        %762 = vadd.xlane.f32.xlu0 %v761
        %v763 = vpop.xlane.xlu0 %762
        %v764 = vpack.c.bf16 %v760, %v760
        %765 = vrot.lane.b32.xlu0 %v381, 48
        %v766 = vpop.permute.xlu0 %765
        %v768 = vsel %vm391, %v764, 0
        %v771 = vsel %vm453, %v766, 0
        %773 = vmatprep.subr.bf16.mxu0 0
        %774 = vmatpush1.bf16.msra.mxu0 %v771
        %775 = vmatprep.subr.bf16.mxu0 0
        %776 = vmatpush1.bf16.msra.mxu0 0
        %777 = vmatprep.subr.bf16.mxu0 0
        %778 = vmatpush1.bf16.msra.mxu0 0
        %779 = vmatprep.subr.bf16.mxu0 0
        %780 = vmatpush1.bf16.msra.mxu0 0
        %781 = vmatprep.subr.bf16.mxu0 0
        %782 = vmatpush1.bf16.msra.mxu0 0
        %783 = vmatprep.subr.bf16.mxu0 0
        %784 = vmatpush1.bf16.msra.mxu0 0
        %785 = vmatprep.subr.bf16.mxu0 0
        %786 = vmatpush1.bf16.msra.mxu0 0
        %787 = vmatprep.subr.bf16.mxu0 0
        %788 = vmatpush1.bf16.msra.mxu0 0
        %789 = vmatprep.subr.bf16.mxu0 0
        %790 = vmatpush1.bf16.msra.mxu0 0
        %791 = vmatprep.subr.bf16.mxu0 0
        %792 = vmatpush1.bf16.msra.mxu0 0
        %793 = vmatprep.subr.bf16.mxu0 0
        %794 = vmatpush1.bf16.msra.mxu0 0
        %795 = vmatprep.subr.bf16.mxu0 0
        %796 = vmatpush1.bf16.msra.mxu0 0
        %797 = vmatprep.subr.bf16.mxu0 0
        %798 = vmatpush1.bf16.msra.mxu0 0
        %799 = vmatprep.subr.bf16.mxu0 0
        %800 = vmatpush1.bf16.msra.mxu0 0
        %801 = vmatprep.subr.bf16.mxu0 0
        %802 = vmatpush1.bf16.msra.mxu0 0
        %803 = vmatprep.subr.bf16.mxu0 0
        %804 = vmatpush1.bf16.msra.mxu0 0
        %805 = vmatprep.mubr.bf16.mxu0 0
        %806 = vmatmul.mubr.bf16.gmra.mrb[0].mxu0 %v768
        %v807 = vpop.f32.mrb[0].mxu0
        %v808 = vadd.f32 0.0, %v807
        %v809 = vpop.f32.mrb[0].mxu0
        %v810 = vpop.f32.mrb[0].mxu0
        %v811 = vpop.f32.mrb[0].mxu0
        %812 = vdwg.mxu0
        %v813 = vrcp.pop %v763
        %v814 = vmul.f32 %v808, %v813
        %v815 = vpack.c.bf16 %v814, %v814
        %v816 = vld [vmem:[#allocation7 + $0x8] sm:$0xf]
        %v818 = vsel %vm391, %v815, 0
        %v821 = vsel %vm453, %v816, 0
        %823 = vmatprep.subr.bf16.mxu0 0
        %824 = vmatpush1.bf16.msra.mxu0 %v821
        %825 = vmatprep.subr.bf16.mxu0 0
        %826 = vmatpush1.bf16.msra.mxu0 0
        %827 = vmatprep.subr.bf16.mxu0 0
        %828 = vmatpush1.bf16.msra.mxu0 0
        %829 = vmatprep.subr.bf16.mxu0 0
        %830 = vmatpush1.bf16.msra.mxu0 0
        %831 = vmatprep.subr.bf16.mxu0 0
        %832 = vmatpush1.bf16.msra.mxu0 0
        %833 = vmatprep.subr.bf16.mxu0 0
        %834 = vmatpush1.bf16.msra.mxu0 0
        %835 = vmatprep.subr.bf16.mxu0 0
        %836 = vmatpush1.bf16.msra.mxu0 0
        %837 = vmatprep.subr.bf16.mxu0 0
        %838 = vmatpush1.bf16.msra.mxu0 0
        %839 = vmatprep.subr.bf16.mxu0 0
        %840 = vmatpush1.bf16.msra.mxu0 0
        %841 = vmatprep.subr.bf16.mxu0 0
        %842 = vmatpush1.bf16.msra.mxu0 0
        %843 = vmatprep.subr.bf16.mxu0 0
        %844 = vmatpush1.bf16.msra.mxu0 0
        %845 = vmatprep.subr.bf16.mxu0 0
        %846 = vmatpush1.bf16.msra.mxu0 0
        %847 = vmatprep.subr.bf16.mxu0 0
        %848 = vmatpush1.bf16.msra.mxu0 0
        %849 = vmatprep.subr.bf16.mxu0 0
        %850 = vmatpush1.bf16.msra.mxu0 0
        %851 = vmatprep.subr.bf16.mxu0 0
        %852 = vmatpush1.bf16.msra.mxu0 0
        %853 = vmatprep.subr.bf16.mxu0 0
        %854 = vmatpush1.bf16.msra.mxu0 0
        %855 = vmatprep.mubr.bf16.mxu0 0
        %856 = vmatmul.mubr.bf16.gmra.mrb[0].mxu0 %v818
        %v857 = vpop.f32.mrb[0].mxu0
        %v858 = vadd.f32 0.0, %v857
        %v859 = vpop.f32.mrb[0].mxu0
        %v860 = vpop.f32.mrb[0].mxu0
        %v861 = vpop.f32.mrb[0].mxu0
        %862 = vdwg.mxu0
        %v863 = vadd.f32 %v700, %v858
        %864 = vrot.lane.b32.xlu0 %v381, 104
        %v865 = vpop.permute.xlu0 %864
        %866 = vrot.lane.b32.xlu0 %v381, 72
        %v867 = vpop.permute.xlu0 %866
        %v869 = vsel %vm391, %v865, 0
        %v872 = vsel %vm391, %v867, 0
        %874 = vmatprep.subr.bf16.mxu0 0
        %875 = vmatpush1.bf16.xpose.msra.mxu0 %v872
        %876 = vmatprep.subr.bf16.mxu0 0
        %877 = vmatpush1.bf16.xpose.msra.mxu0 0
        %878 = vmatprep.subr.bf16.mxu0 0
        %879 = vmatpush1.bf16.xpose.msra.mxu0 0
        %880 = vmatprep.subr.bf16.mxu0 0
        %881 = vmatpush1.bf16.xpose.msra.mxu0 0
        %882 = vmatprep.subr.bf16.mxu0 0
        %883 = vmatpush1.bf16.xpose.msra.mxu0 0
        %884 = vmatprep.subr.bf16.mxu0 0
        %885 = vmatpush1.bf16.xpose.msra.mxu0 0
        %886 = vmatprep.subr.bf16.mxu0 0
        %887 = vmatpush1.bf16.xpose.msra.mxu0 0
        %888 = vmatprep.subr.bf16.mxu0 0
        %889 = vmatpush1.bf16.xpose.msra.mxu0 0
        %890 = vmatprep.subr.bf16.mxu0 0
        %891 = vmatpush1.bf16.xpose.msra.mxu0 0
        %892 = vmatprep.subr.bf16.mxu0 0
        %893 = vmatpush1.bf16.xpose.msra.mxu0 0
        %894 = vmatprep.subr.bf16.mxu0 0
        %895 = vmatpush1.bf16.xpose.msra.mxu0 0
        %896 = vmatprep.subr.bf16.mxu0 0
        %897 = vmatpush1.bf16.xpose.msra.mxu0 0
        %898 = vmatprep.subr.bf16.mxu0 0
        %899 = vmatpush1.bf16.xpose.msra.mxu0 0
        %900 = vmatprep.subr.bf16.mxu0 0
        %901 = vmatpush1.bf16.xpose.msra.mxu0 0
        %902 = vmatprep.subr.bf16.mxu0 0
        %903 = vmatpush1.bf16.xpose.msra.mxu0 0
        %904 = vmatprep.subr.bf16.mxu0 0
        %905 = vmatpush1.bf16.xpose.msra.mxu0 0
        %906 = vmatprep.mubr.bf16.mxu0 0
        %907 = vmatmul.mubr.bf16.gmra.mrb[0].mxu0 %v869
        %v908 = vpop.f32.mrb[0].mxu0
        %v909 = vadd.f32 %v386, %v908
        %v910 = vpop.f32.mrb[0].mxu0
        %v911 = vpop.f32.mrb[0].mxu0
        %v912 = vpop.f32.mrb[0].mxu0
        %913 = vdwg.mxu0
        %v914 = vsel %vm391, %v909, -inf
        %915 = vmax.xlane.f32.xlu0 %v914
        %v916 = vpop.xlane.xlu0 %915
        %v917 = vsub.f32 %v909, %v916
        %v918 = vmul.f32 %v917, 1.442695
        %v919 = vpow.pop %v918
        %v920 = vsel %vm391, %v919, 0.0
        %921 = vadd.xlane.f32.xlu0 %v920
        %v922 = vpop.xlane.xlu0 %921
        %v923 = vpack.c.bf16 %v919, %v919
        %924 = vrot.lane.b32.xlu0 %v381, 40
        %v925 = vpop.permute.xlu0 %924
        %v927 = vsel %vm391, %v923, 0
        %v930 = vsel %vm453, %v925, 0
        %932 = vmatprep.subr.bf16.mxu0 0
        %933 = vmatpush1.bf16.msra.mxu0 %v930
        %934 = vmatprep.subr.bf16.mxu0 0
        %935 = vmatpush1.bf16.msra.mxu0 0
        %936 = vmatprep.subr.bf16.mxu0 0
        %937 = vmatpush1.bf16.msra.mxu0 0
        %938 = vmatprep.subr.bf16.mxu0 0
        %939 = vmatpush1.bf16.msra.mxu0 0
        %940 = vmatprep.subr.bf16.mxu0 0
        %941 = vmatpush1.bf16.msra.mxu0 0
        %942 = vmatprep.subr.bf16.mxu0 0
        %943 = vmatpush1.bf16.msra.mxu0 0
        %944 = vmatprep.subr.bf16.mxu0 0
        %945 = vmatpush1.bf16.msra.mxu0 0
        %946 = vmatprep.subr.bf16.mxu0 0
        %947 = vmatpush1.bf16.msra.mxu0 0
        %948 = vmatprep.subr.bf16.mxu0 0
        %949 = vmatpush1.bf16.msra.mxu0 0
        %950 = vmatprep.subr.bf16.mxu0 0
        %951 = vmatpush1.bf16.msra.mxu0 0
        %952 = vmatprep.subr.bf16.mxu0 0
        %953 = vmatpush1.bf16.msra.mxu0 0
        %954 = vmatprep.subr.bf16.mxu0 0
        %955 = vmatpush1.bf16.msra.mxu0 0
        %956 = vmatprep.subr.bf16.mxu0 0
        %957 = vmatpush1.bf16.msra.mxu0 0
        %958 = vmatprep.subr.bf16.mxu0 0
        %959 = vmatpush1.bf16.msra.mxu0 0
        %960 = vmatprep.subr.bf16.mxu0 0
        %961 = vmatpush1.bf16.msra.mxu0 0
        %962 = vmatprep.subr.bf16.mxu0 0
        %963 = vmatpush1.bf16.msra.mxu0 0
        %964 = vmatprep.mubr.bf16.mxu0 0
        %965 = vmatmul.mubr.bf16.gmra.mrb[0].mxu0 %v927
        %v966 = vpop.f32.mrb[0].mxu0
        %v967 = vadd.f32 0.0, %v966
        %v968 = vpop.f32.mrb[0].mxu0
        %v969 = vpop.f32.mrb[0].mxu0
        %v970 = vpop.f32.mrb[0].mxu0
        %971 = vdwg.mxu0
        %v972 = vrcp.pop %v922
        %v973 = vmul.f32 %v967, %v972
        %v974 = vpack.c.bf16 %v973, %v973
        %v975 = vld [vmem:[#allocation7 + $0xc] sm:$0xf]
        %v977 = vsel %vm391, %v974, 0
        %v980 = vsel %vm453, %v975, 0
        %982 = vmatprep.subr.bf16.mxu0 0
        %983 = vmatpush1.bf16.msra.mxu0 %v980
        %984 = vmatprep.subr.bf16.mxu0 0
        %985 = vmatpush1.bf16.msra.mxu0 0
        %986 = vmatprep.subr.bf16.mxu0 0
        %987 = vmatpush1.bf16.msra.mxu0 0
        %988 = vmatprep.subr.bf16.mxu0 0
        %989 = vmatpush1.bf16.msra.mxu0 0
        %990 = vmatprep.subr.bf16.mxu0 0
        %991 = vmatpush1.bf16.msra.mxu0 0
        %992 = vmatprep.subr.bf16.mxu0 0
        %993 = vmatpush1.bf16.msra.mxu0 0
        %994 = vmatprep.subr.bf16.mxu0 0
        %995 = vmatpush1.bf16.msra.mxu0 0
        %996 = vmatprep.subr.bf16.mxu0 0
        %997 = vmatpush1.bf16.msra.mxu0 0
        %998 = vmatprep.subr.bf16.mxu0 0
        %999 = vmatpush1.bf16.msra.mxu0 0
        %1000 = vmatprep.subr.bf16.mxu0 0
        %1001 = vmatpush1.bf16.msra.mxu0 0
        %1002 = vmatprep.subr.bf16.mxu0 0
        %1003 = vmatpush1.bf16.msra.mxu0 0
        %1004 = vmatprep.subr.bf16.mxu0 0
        %1005 = vmatpush1.bf16.msra.mxu0 0
        %1006 = vmatprep.subr.bf16.mxu0 0
        %1007 = vmatpush1.bf16.msra.mxu0 0
        %1008 = vmatprep.subr.bf16.mxu0 0
        %1009 = vmatpush1.bf16.msra.mxu0 0
        %1010 = vmatprep.subr.bf16.mxu0 0
        %1011 = vmatpush1.bf16.msra.mxu0 0
        %1012 = vmatprep.subr.bf16.mxu0 0
        %1013 = vmatpush1.bf16.msra.mxu0 0
        %1014 = vmatprep.mubr.bf16.mxu0 0
        %1015 = vmatmul.mubr.bf16.gmra.mrb[0].mxu0 %v977
        %v1016 = vpop.f32.mrb[0].mxu0
        %v1017 = vadd.f32 0.0, %v1016
        %v1018 = vpop.f32.mrb[0].mxu0
        %v1019 = vpop.f32.mrb[0].mxu0
        %v1020 = vpop.f32.mrb[0].mxu0
        %1021 = vdwg.mxu0
        %v1022 = vadd.f32 %v863, %v1017
        %v1023 = vld [vmem:[%s5] sm:$0x1]
        %v1025 = vlaneseq
        %v1026 = vshrl.u32 %v1025, 7
        %v1027 = vsub.s32 0, %v1026
        %v1028 = vrot.slane %v1023, %v1027
        %v1030 = vadd.f32 %v1022, %v1028
        %1031 = vst.msk [vmem:[%s306] sm:$0xff] %vm336, %v1030
        %s1032 = sand.u32 %s168, 1
        %s1033 = scalar_lea.sflag [#allocation4], %s1032
        %s1034 = sand.u32 %s168, 1
        %s1035 = smul.addr %s1034, 8
        %s1036 = scalar_lea.vmem [#allocation8], %s1035
        // Predicated region
        $region57: #{tpu_custom_call.1} parent=43 // pred_check
          %p1037 = pneg %p178
        $region58: #{tpu_custom_call.1} parent=43 // pred_check_branch
          %1039 = sbr.rel (%p1037) target = $region60
        $region59: #{tpu_custom_call.1} parent=43 // pred_region
          %s1041 = ssub.s32 128, 128
          %1042 = vsyncadd %s1033, %s1041
          %s1043 = smul.addr %s24, 128
          %s1044 = scalar_lea.hbm %s6, %s1043
          %s1046 = sshll.u32 %s1036, 4
          %s1047 = int_to_ptr.vmem [resolvable:$true] %s1046
          %1049 = dma.vmem_to_hbm [thread:$0]  %s1047, 128, %s1044, %s1033
        $region60: #{tpu_custom_call.1} parent=43 // pred_fallthru
          _
      $region44: #{tpu_custom_call.1} parent=5 // pred_fallthru
        _
      %p1050 = scmp.le.s32.totalorder 2, %s19
      // Predicated region
      $region61: #{tpu_custom_call.1} parent=5 // pred_check
        %p1051 = pneg %p1050
      $region62: #{tpu_custom_call.1} parent=5 // pred_check_branch
        %1053 = sbr.rel (%p1051) target = $region64
      $region63: #{tpu_custom_call.1} parent=5 // pred_region
        %s1054 = ssub.s32 %s19, 2
        // Predicated region
        $region65: #{tpu_custom_call.1} parent=63 // pred_check
          %p1055 = pneg %p184
        $region66: #{tpu_custom_call.1} parent=63 // pred_check_branch
          %1057 = sbr.rel (%p1055) target = $region68
        $region67: #{tpu_custom_call.1} parent=63 // pred_region
          %s1058 = sand.u32 %s169, 1
          %s1059 = scalar_lea.sflag [#allocation4], %s1058
          %s1060 = sand.u32 %s169, 1
          %s1061 = smul.addr %s1060, 8
          %s1062 = scalar_lea.vmem [#allocation8], %s1061
          %1063 = dma.done %s1059, 128
        $region68: #{tpu_custom_call.1} parent=63 // pred_fallthru
          _
      $region64: #{tpu_custom_call.1} parent=5 // pred_fallthru
        _
    $region6: #{tpu_custom_call.1} parent=1 // loop_footer
      %s23 = sadd.s32 1, %s19
    $region7: #{tpu_custom_call.1} parent=1 // loop_footer_branch
      %18 = sbr.rel target = $region3
    $region8: #{tpu_custom_call.1} parent=1 // loop_exit
      _
    %1064 = vsyncpa [#allocation3], 1
    %s1065 = scalar_lea.sflag [#allocation3], 1
    %1066 = vsyncpa %s1065, 1
    %1067 = vsyncpa [#allocation6], 1
    %1068 = vsyncpa [#allocation4], 1
    %s1069 = scalar_lea.sflag [#allocation4], 1
    %1070 = vsyncpa %s1069, 1

</llo_original>
